<compile_context>
chip_gen: v6e
topology: v6e:2x2x1
jax: 0.10.0
libtpu: 0.0.40
codegen_flags: <defaults>
</compile_context>

<pallas_src>
import functools

import jax
import jax.numpy as jnp
from jax.experimental import pallas as pl
from jax.experimental.pallas import tpu as pltpu


def _round_up(x, m):
    return ((x + m - 1) // m) * m


def _chip_defaults():
    """(row-pack factor P, TensorCores per chip) from the attached TPU generation."""
    kind = ""
    try:
        kind = jax.devices()[0].device_kind.lower()
    except Exception:
        pass
    if "v5e" in kind or "v5 lite" in kind or "v5lite" in kind:
        return 4, 1          # 128x128 MXU, single TensorCore
    if "v4" in kind or "v5p" in kind or "v5 p" in kind:
        return 8, 2          # megacore: 2 TensorCores
    if "v6" in kind:
        return 8, 1          # 256x256 MXU, single TensorCore
    if "v7" in kind:
        return 8, 2          # 2 TensorCores / chip, 64 MiB VMEM per TC
    return 8, 1


_SPLIT_ALIGN = 256        # packed rows: keep per-TC grid steps reasonably sized
_MAX_BLOCK_ROWS = 4096    # packed rows: tiles stay far below v7x's 64 MiB VMEM


def _pick_block_rows(rows, requested, num_tc):
    """Large tiles amortize the ~0.35us/step grid overhead.  On multi-TC chips
    keep >=2 grid steps so the "parallel" axis can shard across TensorCores;
    on single-TC chips a fitting batch is a single tile (no pointless step)."""
    requested = min(_round_up(max(requested, 8), 8), _MAX_BLOCK_ROWS)
    if rows <= requested:
        if num_tc > 1 and rows >= 2 * _SPLIT_ALIGN:
            return _round_up(pl.cdiv(rows, num_tc), _SPLIT_ALIGN)
        return rows          # single tile; block equals the full batch extent
    return requested


def tenny_kernel(x_ref,
                 w1_ref, b1_ref,
                 w2_ref, b2_ref,
                 w3_ref, b3_ref,
                 w4_ref, b4_ref,
                 w5_ref, b5_ref,
                 o_ref):
    """One batch tile of the fused, row-packed 5-layer MLP.

    x_ref:  (bb, P*in)      f32 (cast to the MXU dtype inside the kernel)
    wN_ref: (P*in, P*out)   compute dtype, block-diagonal kron(I_P, W_N)
    bN_ref: (1, P*out)      f32 — bias add and ReLU stay on the VPU in f32
    o_ref:  (bb, P*out5)    same dtype as x; exact bytes, no lane zero-pad in HBM
    """
    # Hoist biases once per grid step (JAX does not CSE broadcast_in_dim).
    b1 = b1_ref[...]
    b2 = b2_ref[...]
    b3 = b3_ref[...]
    b4 = b4_ref[...]
    b5 = b5_ref[...]

    cdt = w1_ref.dtype  # MXU operand dtype (bf16 on the low-precision path)

    def layer(h, w_ref, b, relu=True):
        # astype is a no-op when h already has the compute dtype; on the bf16
        # path the cast rides the VPU here instead of a standalone XLA pass.
        y = jnp.dot(h.astype(cdt), w_ref[...],
                    preferred_element_type=jnp.float32) + b
        return jnp.maximum(y, 0.0) if relu else y

    h = layer(x_ref[...], w1_ref, b1)
    h = layer(h, w2_ref, b2)
    # nn.Dropout(0.5) in eval mode is the identity; nothing to compute here.
    # TODO(synk): training-mode dropout would use pltpu.prng_seed + stateful_bernoulli.
    h = layer(h, w3_ref, b3)
    h = layer(h, w4_ref, b4)
    y = layer(h, w5_ref, b5, relu=False)
    o_ref[...] = y.astype(o_ref.dtype)


@functools.partial(jax.jit, static_argnames=("block_batch", "compute_dtype"))
def tenny_forward(x, params, *, block_batch=8192, compute_dtype=jnp.float32):
    """x: (B, input_size) f32. params: dict of (in,out) weights and (1,out) biases."""
    B, in_size = x.shape
    out_size = params["w5"].shape[1]

    pack, num_tc = _chip_defaults()
    cdt = jnp.dtype(compute_dtype)

    # ---- one-time operand prep (outside the Pallas grid) ----
    # Row-pack P batch rows into the lane dimension.  The reshape is free
    # (row-major); weights become block-diagonal and biases are tiled, so the
    # same 5-dot chain runs on lane-dense shapes with no extra output bytes.
    B_pad = _round_up(B, pack)
    xp = x if B_pad == B else jnp.pad(x, ((0, B_pad - B), (0, 0)))
    rows = B_pad // pack
    xp = xp.reshape(rows, pack * in_size)

    eye = jnp.eye(pack, dtype=cdt)
    weights = []
    biases = []
    for idx in range(1, 6):
        w = params[f"w{idx}"].astype(cdt)          # tiny, one-time cast
        b = params[f"b{idx}"]                      # bias / ReLU epilogue stays f32
        weights.append(jnp.kron(eye, w))           # (P*in, P*out) block-diagonal
        biases.append(jnp.tile(b, (1, pack)))      # (1, P*out)

    # ---- batch tiling (in packed rows) ----
    bb = _pick_block_rows(rows, max(8, block_batch // pack), num_tc)
    grid = (pl.cdiv(rows, bb),)

    def x_map(i):
        return (i, 0)

    def const_map(i):
        # Grid-invariant blocks: weight/bias tiles are DMA'd once and reused
        # across all batch tiles (no per-step re-copy of unchanged blocks).
        return (0, 0)

    in_specs = [pl.BlockSpec((bb, pack * in_size), x_map)]
    operands = [xp]
    for w, b in zip(weights, biases):
        in_specs.append(pl.BlockSpec(w.shape, const_map))
        in_specs.append(pl.BlockSpec(b.shape, const_map))
        operands.append(w)
        operands.append(b)

    yp = pl.pallas_call(
        tenny_kernel,
        out_shape=jax.ShapeDtypeStruct((rows, pack * out_size), x.dtype),
        grid_spec=pl.GridSpec(
            grid=grid,
            in_specs=in_specs,
            out_specs=pl.BlockSpec((bb, pack * out_size), x_map),
        ),
        compiler_params=pltpu.CompilerParams(
            dimension_semantics=("parallel",),
            vmem_limit_bytes=32 * 1024 * 1024),
    )(*operands)

    # Unpack rows and drop any batch padding; output HBM bytes were exact.
    return yp.reshape(B_pad, out_size)[:B]


def init_params(key, input_size, hidden_size, output_size):
    """Deterministic init mimicking nn.Linear default (uniform(-1/sqrt(in), 1/sqrt(in))).
    Weights stored pre-transposed as (in, out); biases as (1, out)."""
    dims = [(input_size, hidden_size),
            (hidden_size, hidden_size),
            (hidden_size, hidden_size),
            (hidden_size, hidden_size),
            (hidden_size, output_size)]
    params = {}
    for idx, (fan_in, fan_out) in enumerate(dims, start=1):
        key, kw, kb = jax.random.split(key, 3)
        bound = 1.0 / (fan_in ** 0.5)
        params[f"w{idx}"] = jax.random.uniform(
            kw, (fan_in, fan_out), jnp.float32, minval=-bound, maxval=bound)
        params[f"b{idx}"] = jax.random.uniform(
            kb, (1, fan_out), jnp.float32, minval=-bound, maxval=bound)
    return params


def tenny_reference(x, params):
    """Pure-JAX reference for correctness checking."""
    h = jax.nn.relu(x @ params["w1"] + params["b1"])
    h = jax.nn.relu(h @ params["w2"] + params["b2"])
    # dropout: identity in eval mode
    h = jax.nn.relu(h @ params["w3"] + params["b3"])
    h = jax.nn.relu(h @ params["w4"] + params["b4"])
    return h @ params["w5"] + params["b5"]


if __name__ == "__main__":
    input_size, hidden_size, output_size = 16, 32, 4

    key = jax.random.PRNGKey(0)
    key, kx = jax.random.split(key)
    params = init_params(key, input_size, hidden_size, output_size)

    # Small smoke test: single batch tile (B a multiple of the pack factor).
    x_small = jax.random.normal(kx, (64, input_size), jnp.float32)
    out = jax.block_until_ready(tenny_forward(x_small, params))
    ref = tenny_reference(x_small, params)
    assert out.shape == (64, output_size), out.shape
    assert jnp.allclose(out, ref, atol=1e-4, rtol=1e-4), "f32 mismatch vs reference"

    # Multi-step grid with a ragged final tile (exercises masked output writeback).
    key, kx2 = jax.random.split(key)
    x_ragged = jax.random.normal(kx2, (200, input_size), jnp.float32)
    out2 = jax.block_until_ready(tenny_forward(x_ragged, params, block_batch=64))
    ref2 = tenny_reference(x_ragged, params)
    assert out2.shape == (200, output_size), out2.shape
    assert jnp.allclose(out2, ref2, atol=1e-4, rtol=1e-4), "ragged-grid mismatch"

    # Batch not a multiple of the pack factor (exercises the row-pad path).
    key, kx3 = jax.random.split(key)
    x_odd = jax.random.normal(kx3, (61, input_size), jnp.float32)
    out3 = jax.block_until_ready(tenny_forward(x_odd, params))
    ref3 = tenny_reference(x_odd, params)
    assert out3.shape == (61, output_size), out3.shape
    assert jnp.allclose(out3, ref3, atol=1e-4, rtol=1e-4), "pad-path mismatch"

    # bf16 MXU operands; accumulation stays f32, bias/ReLU stay f32.
    out4 = jax.block_until_ready(
        tenny_forward(x_small, params, compute_dtype=jnp.bfloat16))
    assert jnp.allclose(out4, ref, atol=5e-2, rtol=5e-2), "bf16 path mismatch"

    print("KERNEL_OK")
</pallas_src>

<mosaic_0001>
module attributes {stable_mosaic.version = 11 : i64} {
  func.func @tenny_kernel(%arg0: i32, %arg1: memref<8x128xf32, #tpu.memory_space<vmem>>, %arg2: memref<128x256xf32, #tpu.memory_space<vmem>>, %arg3: memref<1x256xf32, #tpu.memory_space<vmem>>, %arg4: memref<256x256xf32, #tpu.memory_space<vmem>>, %arg5: memref<1x256xf32, #tpu.memory_space<vmem>>, %arg6: memref<256x256xf32, #tpu.memory_space<vmem>>, %arg7: memref<1x256xf32, #tpu.memory_space<vmem>>, %arg8: memref<256x256xf32, #tpu.memory_space<vmem>>, %arg9: memref<1x256xf32, #tpu.memory_space<vmem>>, %arg10: memref<256x32xf32, #tpu.memory_space<vmem>>, %arg11: memref<1x32xf32, #tpu.memory_space<vmem>>, %arg12: memref<8x32xf32, #tpu.memory_space<vmem>>) attributes {dimension_semantics = [#tpu.dimension_semantics<parallel>], iteration_bounds = array<i64: 1>, scalar_prefetch = 0 : i64, scratch_operands = 0 : i64, tpu.core_type = #tpu.core_type<tc>, window_params = [{transform_indices = @transform_0, window_bounds = array<i64: 8, 128>}, {pipeline_mode = #tpu.pipeline_mode<synchronous>, transform_indices = @transform_1, window_bounds = array<i64: 128, 256>}, {pipeline_mode = #tpu.pipeline_mode<synchronous>, transform_indices = @transform_2, window_bounds = array<i64: 1, 256>}, {pipeline_mode = #tpu.pipeline_mode<synchronous>, transform_indices = @transform_3, window_bounds = array<i64: 256, 256>}, {pipeline_mode = #tpu.pipeline_mode<synchronous>, transform_indices = @transform_4, window_bounds = array<i64: 1, 256>}, {pipeline_mode = #tpu.pipeline_mode<synchronous>, transform_indices = @transform_5, window_bounds = array<i64: 256, 256>}, {pipeline_mode = #tpu.pipeline_mode<synchronous>, transform_indices = @transform_6, window_bounds = array<i64: 1, 256>}, {pipeline_mode = #tpu.pipeline_mode<synchronous>, transform_indices = @transform_7, window_bounds = array<i64: 256, 256>}, {pipeline_mode = #tpu.pipeline_mode<synchronous>, transform_indices = @transform_8, window_bounds = array<i64: 1, 256>}, {pipeline_mode = #tpu.pipeline_mode<synchronous>, transform_indices = @transform_9, window_bounds = array<i64: 256, 32>}, {pipeline_mode = #tpu.pipeline_mode<synchronous>, transform_indices = @transform_10, window_bounds = array<i64: 1, 32>}, {transform_indices = @transform_11, window_bounds = array<i64: 8, 32>}]} {
    %c0 = arith.constant 0 : index
    %c0_0 = arith.constant 0 : index
    %0 = vector.load %arg3[%c0, %c0_0] : memref<1x256xf32, #tpu.memory_space<vmem>>, vector<1x256xf32>
    %c0_1 = arith.constant 0 : index
    %c0_2 = arith.constant 0 : index
    %1 = vector.load %arg5[%c0_1, %c0_2] : memref<1x256xf32, #tpu.memory_space<vmem>>, vector<1x256xf32>
    %c0_3 = arith.constant 0 : index
    %c0_4 = arith.constant 0 : index
    %2 = vector.load %arg7[%c0_3, %c0_4] : memref<1x256xf32, #tpu.memory_space<vmem>>, vector<1x256xf32>
    %c0_5 = arith.constant 0 : index
    %c0_6 = arith.constant 0 : index
    %3 = vector.load %arg9[%c0_5, %c0_6] : memref<1x256xf32, #tpu.memory_space<vmem>>, vector<1x256xf32>
    %c0_7 = arith.constant 0 : index
    %c0_8 = arith.constant 0 : index
    %4 = vector.load %arg11[%c0_7, %c0_8] : memref<1x32xf32, #tpu.memory_space<vmem>>, vector<1x32xf32>
    %c0_9 = arith.constant 0 : index
    %c0_10 = arith.constant 0 : index
    %5 = vector.load %arg1[%c0_9, %c0_10] : memref<8x128xf32, #tpu.memory_space<vmem>>, vector<8x128xf32>
    %c0_11 = arith.constant 0 : index
    %c0_12 = arith.constant 0 : index
    %6 = vector.load %arg2[%c0_11, %c0_12] : memref<128x256xf32, #tpu.memory_space<vmem>>, vector<128x256xf32>
    %cst = arith.constant dense<0.000000e+00> : vector<8x256xf32>
    %7 = tpu.matmul %5, %6, %cst {dimension_numbers = #tpu.dot_dimension_numbers<[1], [0], [0], [1], [0, 0, 1, 1], [], []>} : vector<8x128xf32>, vector<128x256xf32>, vector<8x256xf32> -> vector<8x256xf32>
    %8 = vector.broadcast %0 : vector<1x256xf32> to vector<8x256xf32>
    %9 = arith.addf %7, %8 : vector<8x256xf32>
    %cst_13 = arith.constant 0.000000e+00 : f32
    %10 = vector.broadcast %cst_13 : f32 to vector<8x256xf32>
    %11 = arith.maximumf %9, %10 : vector<8x256xf32>
    %c0_14 = arith.constant 0 : index
    %c0_15 = arith.constant 0 : index
    %12 = vector.load %arg4[%c0_14, %c0_15] : memref<256x256xf32, #tpu.memory_space<vmem>>, vector<256x256xf32>
    %cst_16 = arith.constant dense<0.000000e+00> : vector<8x256xf32>
    %13 = tpu.matmul %11, %12, %cst_16 {dimension_numbers = #tpu.dot_dimension_numbers<[1], [0], [0], [1], [0, 0, 1, 1], [], []>} : vector<8x256xf32>, vector<256x256xf32>, vector<8x256xf32> -> vector<8x256xf32>
    %14 = vector.broadcast %1 : vector<1x256xf32> to vector<8x256xf32>
    %15 = arith.addf %13, %14 : vector<8x256xf32>
    %cst_17 = arith.constant 0.000000e+00 : f32
    %16 = vector.broadcast %cst_17 : f32 to vector<8x256xf32>
    %17 = arith.maximumf %15, %16 : vector<8x256xf32>
    %c0_18 = arith.constant 0 : index
    %c0_19 = arith.constant 0 : index
    %18 = vector.load %arg6[%c0_18, %c0_19] : memref<256x256xf32, #tpu.memory_space<vmem>>, vector<256x256xf32>
    %cst_20 = arith.constant dense<0.000000e+00> : vector<8x256xf32>
    %19 = tpu.matmul %17, %18, %cst_20 {dimension_numbers = #tpu.dot_dimension_numbers<[1], [0], [0], [1], [0, 0, 1, 1], [], []>} : vector<8x256xf32>, vector<256x256xf32>, vector<8x256xf32> -> vector<8x256xf32>
    %20 = vector.broadcast %2 : vector<1x256xf32> to vector<8x256xf32>
    %21 = arith.addf %19, %20 : vector<8x256xf32>
    %cst_21 = arith.constant 0.000000e+00 : f32
    %22 = vector.broadcast %cst_21 : f32 to vector<8x256xf32>
    %23 = arith.maximumf %21, %22 : vector<8x256xf32>
    %c0_22 = arith.constant 0 : index
    %c0_23 = arith.constant 0 : index
    %24 = vector.load %arg8[%c0_22, %c0_23] : memref<256x256xf32, #tpu.memory_space<vmem>>, vector<256x256xf32>
    %cst_24 = arith.constant dense<0.000000e+00> : vector<8x256xf32>
    %25 = tpu.matmul %23, %24, %cst_24 {dimension_numbers = #tpu.dot_dimension_numbers<[1], [0], [0], [1], [0, 0, 1, 1], [], []>} : vector<8x256xf32>, vector<256x256xf32>, vector<8x256xf32> -> vector<8x256xf32>
    %26 = vector.broadcast %3 : vector<1x256xf32> to vector<8x256xf32>
    %27 = arith.addf %25, %26 : vector<8x256xf32>
    %cst_25 = arith.constant 0.000000e+00 : f32
    %28 = vector.broadcast %cst_25 : f32 to vector<8x256xf32>
    %29 = arith.maximumf %27, %28 : vector<8x256xf32>
    %c0_26 = arith.constant 0 : index
    %c0_27 = arith.constant 0 : index
    %30 = vector.load %arg10[%c0_26, %c0_27] : memref<256x32xf32, #tpu.memory_space<vmem>>, vector<256x32xf32>
    %cst_28 = arith.constant dense<0.000000e+00> : vector<8x32xf32>
    %31 = tpu.matmul %29, %30, %cst_28 {dimension_numbers = #tpu.dot_dimension_numbers<[1], [0], [0], [1], [0, 0, 1, 1], [], []>} : vector<8x256xf32>, vector<256x32xf32>, vector<8x32xf32> -> vector<8x32xf32>
    %32 = vector.broadcast %4 : vector<1x32xf32> to vector<8x32xf32>
    %33 = arith.addf %31, %32 : vector<8x32xf32>
    %c0_29 = arith.constant 0 : index
    %c0_30 = arith.constant 0 : index
    %34 = vector.load %arg12[%c0_29, %c0_30] : memref<8x32xf32, #tpu.memory_space<vmem>>, vector<8x32xf32>
    tpu.vector_store %arg12[%c0_29, %c0_30], %33 {strides = array<i32>} : memref<8x32xf32, #tpu.memory_space<vmem>>, vector<8x32xf32>,
    return
  }
  func.func @transform_0(%arg0: i32) -> (i32, i32) {
    %c0_i32 = arith.constant 0 : i32
    %c0_i32_0 = arith.constant 0 : i32
    return %arg0, %c0_i32 : i32, i32
  }
  func.func @transform_1(%arg0: i32) -> (i32, i32) {
    %c0_i32 = arith.constant 0 : i32
    %c0_i32_0 = arith.constant 0 : i32
    %c0_i32_1 = arith.constant 0 : i32
    return %c0_i32, %c0_i32_0 : i32, i32
  }
  func.func @transform_2(%arg0: i32) -> (i32, i32) {
    %c0_i32 = arith.constant 0 : i32
    %c0_i32_0 = arith.constant 0 : i32
    %c0_i32_1 = arith.constant 0 : i32
    return %c0_i32, %c0_i32_0 : i32, i32
  }
  func.func @transform_3(%arg0: i32) -> (i32, i32) {
    %c0_i32 = arith.constant 0 : i32
    %c0_i32_0 = arith.constant 0 : i32
    %c0_i32_1 = arith.constant 0 : i32
    return %c0_i32, %c0_i32_0 : i32, i32
  }
  func.func @transform_4(%arg0: i32) -> (i32, i32) {
    %c0_i32 = arith.constant 0 : i32
    %c0_i32_0 = arith.constant 0 : i32
    %c0_i32_1 = arith.constant 0 : i32
    return %c0_i32, %c0_i32_0 : i32, i32
  }
  func.func @transform_5(%arg0: i32) -> (i32, i32) {
    %c0_i32 = arith.constant 0 : i32
    %c0_i32_0 = arith.constant 0 : i32
    %c0_i32_1 = arith.constant 0 : i32
    return %c0_i32, %c0_i32_0 : i32, i32
  }
  func.func @transform_6(%arg0: i32) -> (i32, i32) {
    %c0_i32 = arith.constant 0 : i32
    %c0_i32_0 = arith.constant 0 : i32
    %c0_i32_1 = arith.constant 0 : i32
    return %c0_i32, %c0_i32_0 : i32, i32
  }
  func.func @transform_7(%arg0: i32) -> (i32, i32) {
    %c0_i32 = arith.constant 0 : i32
    %c0_i32_0 = arith.constant 0 : i32
    %c0_i32_1 = arith.constant 0 : i32
    return %c0_i32, %c0_i32_0 : i32, i32
  }
  func.func @transform_8(%arg0: i32) -> (i32, i32) {
    %c0_i32 = arith.constant 0 : i32
    %c0_i32_0 = arith.constant 0 : i32
    %c0_i32_1 = arith.constant 0 : i32
    return %c0_i32, %c0_i32_0 : i32, i32
  }
  func.func @transform_9(%arg0: i32) -> (i32, i32) {
    %c0_i32 = arith.constant 0 : i32
    %c0_i32_0 = arith.constant 0 : i32
    %c0_i32_1 = arith.constant 0 : i32
    return %c0_i32, %c0_i32_0 : i32, i32
  }
  func.func @transform_10(%arg0: i32) -> (i32, i32) {
    %c0_i32 = arith.constant 0 : i32
    %c0_i32_0 = arith.constant 0 : i32
    %c0_i32_1 = arith.constant 0 : i32
    return %c0_i32, %c0_i32_0 : i32, i32
  }
  func.func @transform_11(%arg0: i32) -> (i32, i32) {
    %c0_i32 = arith.constant 0 : i32
    %c0_i32_0 = arith.constant 0 : i32
    return %arg0, %c0_i32 : i32, i32
  }
}

</mosaic_0001>

<llo_original>
// kernel: tenny_forward.1
$region0: #{tenny_forward.1}
  #allocation0 [shape = 'u32[]', space=smem, size = 0x4, offset = 0x4, fixed_abs, tag = 'smem constant byte address 0x4 - core index']
  #allocation1 [shape = 'u32[144,128]{1,0:T(1,128)}', space=vmem, size = 0x12000, scoped, tag = 'internal scratch']
  %s0 = inlined_call_operand.vmem [shape: f32[8,128], index: 0, kind: input, shape index: {}]
  %s1 = inlined_call_operand.vmem [shape: f32[128,256], index: 1, kind: input, shape index: {}]
  %s2 = inlined_call_operand.vmem [shape: f32[1,256], index: 2, kind: input, shape index: {}]
  %s3 = inlined_call_operand.vmem [shape: f32[256,256], index: 3, kind: input, shape index: {}]
  %s4 = inlined_call_operand.vmem [shape: f32[1,256], index: 4, kind: input, shape index: {}]
  %s5 = inlined_call_operand.vmem [shape: f32[256,256], index: 5, kind: input, shape index: {}]
  %s6 = inlined_call_operand.vmem [shape: f32[1,256], index: 6, kind: input, shape index: {}]
  %s7 = inlined_call_operand.vmem [shape: f32[256,256], index: 7, kind: input, shape index: {}]
  %s8 = inlined_call_operand.vmem [shape: f32[1,256], index: 8, kind: input, shape index: {}]
  %s9 = inlined_call_operand.vmem [shape: f32[256,32], index: 9, kind: input, shape index: {}]
  %s10 = inlined_call_operand.vmem [shape: f32[1,32], index: 10, kind: input, shape index: {}]
  %s11 = inlined_call_operand.vmem [shape: f32[8,32], index: 11, kind: output, shape index: {}]
  %s12 = sld [smem:[#allocation0]]
  $region54: #{tenny_forward.1} parent=0
    _
  %s14 = ssub.s32 1, %s12
  %s15 = scalar_select 0, %s14, %s12
  // Predicated region
  $region2: #{tenny_forward.1} parent=0 // pred_check
    _
  $region3: #{tenny_forward.1} parent=0 // pred_check_branch
    %17 = sbr.rel (0) target = $region5
  $region4: #{tenny_forward.1} parent=0 // pred_region
    _
  $region5: #{tenny_forward.1} parent=0 // pred_fallthru
    _
  // Predicated region
  $region6: #{tenny_forward.1} parent=0 // pred_check
    _
  $region7: #{tenny_forward.1} parent=0 // pred_check_branch
    %19 = sbr.rel (0) target = $region9
  $region8: #{tenny_forward.1} parent=0 // pred_region
    _
  $region9: #{tenny_forward.1} parent=0 // pred_fallthru
    _
  // Predicated region
  $region10: #{tenny_forward.1} parent=0 // pred_check
    _
  $region11: #{tenny_forward.1} parent=0 // pred_check_branch
    %21 = sbr.rel (0) target = $region13
  $region12: #{tenny_forward.1} parent=0 // pred_region
    _
  $region13: #{tenny_forward.1} parent=0 // pred_fallthru
    _
  // Predicated region
  $region14: #{tenny_forward.1} parent=0 // pred_check
    _
  $region15: #{tenny_forward.1} parent=0 // pred_check_branch
    %23 = sbr.rel (0) target = $region17
  $region16: #{tenny_forward.1} parent=0 // pred_region
    _
  $region17: #{tenny_forward.1} parent=0 // pred_fallthru
    _
  // Predicated region
  $region18: #{tenny_forward.1} parent=0 // pred_check
    _
  $region19: #{tenny_forward.1} parent=0 // pred_check_branch
    %25 = sbr.rel (0) target = $region21
  $region20: #{tenny_forward.1} parent=0 // pred_region
    _
  $region21: #{tenny_forward.1} parent=0 // pred_fallthru
    _
  // Predicated region
  $region22: #{tenny_forward.1} parent=0 // pred_check
    _
  $region23: #{tenny_forward.1} parent=0 // pred_check_branch
    %27 = sbr.rel (0) target = $region25
  $region24: #{tenny_forward.1} parent=0 // pred_region
    _
  $region25: #{tenny_forward.1} parent=0 // pred_fallthru
    _
  // Predicated region
  $region26: #{tenny_forward.1} parent=0 // pred_check
    _
  $region27: #{tenny_forward.1} parent=0 // pred_check_branch
    %29 = sbr.rel (0) target = $region29
  $region28: #{tenny_forward.1} parent=0 // pred_region
    _
  $region29: #{tenny_forward.1} parent=0 // pred_fallthru
    _
  // Predicated region
  $region30: #{tenny_forward.1} parent=0 // pred_check
    _
  $region31: #{tenny_forward.1} parent=0 // pred_check_branch
    %31 = sbr.rel (0) target = $region33
  $region32: #{tenny_forward.1} parent=0 // pred_region
    _
  $region33: #{tenny_forward.1} parent=0 // pred_fallthru
    _
  // Predicated region
  $region34: #{tenny_forward.1} parent=0 // pred_check
    _
  $region35: #{tenny_forward.1} parent=0 // pred_check_branch
    %33 = sbr.rel (0) target = $region37
  $region36: #{tenny_forward.1} parent=0 // pred_region
    _
  $region37: #{tenny_forward.1} parent=0 // pred_fallthru
    _
  // Predicated region
  $region38: #{tenny_forward.1} parent=0 // pred_check
    _
  $region39: #{tenny_forward.1} parent=0 // pred_check_branch
    %35 = sbr.rel (0) target = $region41
  $region40: #{tenny_forward.1} parent=0 // pred_region
    _
  $region41: #{tenny_forward.1} parent=0 // pred_fallthru
    _
  // Predicated region
  $region42: #{tenny_forward.1} parent=0 // pred_check
    _
  $region43: #{tenny_forward.1} parent=0 // pred_check_branch
    %37 = sbr.rel (0) target = $region45
  $region44: #{tenny_forward.1} parent=0 // pred_region
    _
  $region45: #{tenny_forward.1} parent=0 // pred_fallthru
    _
  %v38 = vld [vmem:[%s2] sm:$0x3]
  %v39 = vld [vmem:[%s4] sm:$0x3]
  %v40 = vld [vmem:[%s6] sm:$0x3]
  %v41 = vld [vmem:[%s8] sm:$0x3]
  %v42 = vld [vmem:[%s10] sm:$0x1]
  %v43 = vld [vmem:[%s0] sm:$0xff]
  %v44 = vld [vmem:[%s1] sm:$0xff]
  %v45 = vld [vmem:[%s1 + $0x8] sm:$0xff]
  %v46 = vld [vmem:[%s1 + $0x10] sm:$0xff]
  %v47 = vld [vmem:[%s1 + $0x18] sm:$0xff]
  %v48 = vld [vmem:[%s1 + $0x20] sm:$0xff]
  %v49 = vld [vmem:[%s1 + $0x28] sm:$0xff]
  %v50 = vld [vmem:[%s1 + $0x30] sm:$0xff]
  %v51 = vld [vmem:[%s1 + $0x38] sm:$0xff]
  %v52 = vld [vmem:[%s1 + $0x40] sm:$0xff]
  %v53 = vld [vmem:[%s1 + $0x48] sm:$0xff]
  %v54 = vld [vmem:[%s1 + $0x50] sm:$0xff]
  %v55 = vld [vmem:[%s1 + $0x58] sm:$0xff]
  %v56 = vld [vmem:[%s1 + $0x60] sm:$0xff]
  %v57 = vld [vmem:[%s1 + $0x68] sm:$0xff]
  %v58 = vld [vmem:[%s1 + $0x70] sm:$0xff]
  %v59 = vld [vmem:[%s1 + $0x78] sm:$0xff]
  %v60 = vld [vmem:[%s1 + $0x80] sm:$0xff]
  %v61 = vld [vmem:[%s1 + $0x88] sm:$0xff]
  %v62 = vld [vmem:[%s1 + $0x90] sm:$0xff]
  %v63 = vld [vmem:[%s1 + $0x98] sm:$0xff]
  %v64 = vld [vmem:[%s1 + $0xa0] sm:$0xff]
  %v65 = vld [vmem:[%s1 + $0xa8] sm:$0xff]
  %v66 = vld [vmem:[%s1 + $0xb0] sm:$0xff]
  %v67 = vld [vmem:[%s1 + $0xb8] sm:$0xff]
  %v68 = vld [vmem:[%s1 + $0xc0] sm:$0xff]
  %v69 = vld [vmem:[%s1 + $0xc8] sm:$0xff]
  %v70 = vld [vmem:[%s1 + $0xd0] sm:$0xff]
  %v71 = vld [vmem:[%s1 + $0xd8] sm:$0xff]
  %v72 = vld [vmem:[%s1 + $0xe0] sm:$0xff]
  %v73 = vld [vmem:[%s1 + $0xe8] sm:$0xff]
  %v74 = vld [vmem:[%s1 + $0xf0] sm:$0xff]
  %v75 = vld [vmem:[%s1 + $0xf8] sm:$0xff]
  %v77 = vlaneseq
  %v78 = vshrl.u32 %v77, 7
  %v79 = vsub.s32 0, %v78
  %v80 = vrot.slane %v38, %v79
  %v81 = vlaneseq
  %v82 = vshrl.u32 %v81, 7
  %v83 = vsub.s32 1, %v82
  %v84 = vrot.slane %v38, %v83
  %87 = vmatprep.subr.mxu0 %v75
  %88 = vmatpush1.msra.mxu0 %v74
  %89 = vmatprep.subr.mxu0 %v73
  %90 = vmatpush1.msra.mxu0 %v72
  %91 = vmatprep.subr.mxu0 %v71
  %92 = vmatpush1.msra.mxu0 %v70
  %93 = vmatprep.subr.mxu0 %v69
  %94 = vmatpush1.msra.mxu0 %v68
  %95 = vmatprep.subr.mxu0 %v67
  %96 = vmatpush1.msra.mxu0 %v66
  %97 = vmatprep.subr.mxu0 %v65
  %98 = vmatpush1.msra.mxu0 %v64
  %99 = vmatprep.subr.mxu0 %v63
  %100 = vmatpush1.msra.mxu0 %v62
  %101 = vmatprep.subr.mxu0 %v61
  %102 = vmatpush1.msra.mxu0 %v60
  %103 = vmatprep.subr.mxu0 %v59
  %104 = vmatpush1.msra.mxu0 %v58
  %105 = vmatprep.subr.mxu0 %v57
  %106 = vmatpush1.msra.mxu0 %v56
  %107 = vmatprep.subr.mxu0 %v55
  %108 = vmatpush1.msra.mxu0 %v54
  %109 = vmatprep.subr.mxu0 %v53
  %110 = vmatpush1.msra.mxu0 %v52
  %111 = vmatprep.subr.mxu0 %v51
  %112 = vmatpush1.msra.mxu0 %v50
  %113 = vmatprep.subr.mxu0 %v49
  %114 = vmatpush1.msra.mxu0 %v48
  %115 = vmatprep.subr.mxu0 %v47
  %116 = vmatpush1.msra.mxu0 %v46
  %117 = vmatprep.subr.mxu0 %v45
  %118 = vmatpush1.msra.mxu0 %v44
  %119 = vmatprep.subr.mxu0 0.0
  %120 = vmatpush2.msra.mxu0 0.0
  %121 = vmatprep.subr.mxu0 0.0
  %122 = vmatpush2.msra.mxu0 0.0
  %123 = vmatprep.subr.mxu0 0.0
  %124 = vmatpush2.msra.mxu0 0.0
  %125 = vmatprep.subr.mxu0 0.0
  %126 = vmatpush2.msra.mxu0 0.0
  %127 = vmatprep.subr.mxu0 0.0
  %128 = vmatpush2.msra.mxu0 0.0
  %129 = vmatprep.subr.mxu0 0.0
  %130 = vmatpush2.msra.mxu0 0.0
  %131 = vmatprep.subr.mxu0 0.0
  %132 = vmatpush2.msra.mxu0 0.0
  %133 = vmatprep.subr.mxu0 0.0
  %134 = vmatpush2.msra.mxu0 0.0
  %135 = vmatprep.subr.mxu0 0.0
  %136 = vmatpush2.msra.mxu0 0.0
  %137 = vmatprep.subr.mxu0 0.0
  %138 = vmatpush2.msra.mxu0 0.0
  %139 = vmatprep.subr.mxu0 0.0
  %140 = vmatpush2.msra.mxu0 0.0
  %141 = vmatprep.subr.mxu0 0.0
  %142 = vmatpush2.msra.mxu0 0.0
  %143 = vmatprep.subr.mxu0 0.0
  %144 = vmatpush2.msra.mxu0 0.0
  %145 = vmatprep.subr.mxu0 0.0
  %146 = vmatpush2.msra.mxu0 0.0
  %147 = vmatprep.subr.mxu0 0.0
  %148 = vmatpush2.msra.mxu0 0.0
  %149 = vmatprep.subr.mxu0 0.0
  %150 = vmatpush2.msra.mxu0 0.0
  %151 = vmatprep.mubr.f32.mxu0 0.0
  %152 = vmatmul.mubr.f32.gmra.mxu0 %v43
  %v153 = vpop.f32.mrf.mxu0
  %v154 = vadd.f32 %v80, %v153
  %v155 = vpop.f32.mrf.mxu0
  %v156 = vadd.f32 %v84, %v155
  %157 = vdwg.mxu0
  %v158 = vmax.f32 %v154, 0.0
  %v159 = vmax.f32 %v156, 0.0
  %v160 = vld [vmem:[%s3] sm:$0xff]
  %v161 = vld [vmem:[%s3 + $0x8] sm:$0xff]
  %v162 = vld [vmem:[%s3 + $0x10] sm:$0xff]
  %v163 = vld [vmem:[%s3 + $0x18] sm:$0xff]
  %v164 = vld [vmem:[%s3 + $0x20] sm:$0xff]
  %v165 = vld [vmem:[%s3 + $0x28] sm:$0xff]
  %v166 = vld [vmem:[%s3 + $0x30] sm:$0xff]
  %v167 = vld [vmem:[%s3 + $0x38] sm:$0xff]
  %v168 = vld [vmem:[%s3 + $0x40] sm:$0xff]
  %v169 = vld [vmem:[%s3 + $0x48] sm:$0xff]
  %v170 = vld [vmem:[%s3 + $0x50] sm:$0xff]
  %v171 = vld [vmem:[%s3 + $0x58] sm:$0xff]
  %v172 = vld [vmem:[%s3 + $0x60] sm:$0xff]
  %v173 = vld [vmem:[%s3 + $0x68] sm:$0xff]
  %v174 = vld [vmem:[%s3 + $0x70] sm:$0xff]
  %v175 = vld [vmem:[%s3 + $0x78] sm:$0xff]
  %v176 = vld [vmem:[%s3 + $0x80] sm:$0xff]
  %v177 = vld [vmem:[%s3 + $0x88] sm:$0xff]
  %v178 = vld [vmem:[%s3 + $0x90] sm:$0xff]
  %v179 = vld [vmem:[%s3 + $0x98] sm:$0xff]
  %v180 = vld [vmem:[%s3 + $0xa0] sm:$0xff]
  %v181 = vld [vmem:[%s3 + $0xa8] sm:$0xff]
  %v182 = vld [vmem:[%s3 + $0xb0] sm:$0xff]
  %v183 = vld [vmem:[%s3 + $0xb8] sm:$0xff]
  %v184 = vld [vmem:[%s3 + $0xc0] sm:$0xff]
  %v185 = vld [vmem:[%s3 + $0xc8] sm:$0xff]
  %v186 = vld [vmem:[%s3 + $0xd0] sm:$0xff]
  %v187 = vld [vmem:[%s3 + $0xd8] sm:$0xff]
  %v188 = vld [vmem:[%s3 + $0xe0] sm:$0xff]
  %v189 = vld [vmem:[%s3 + $0xe8] sm:$0xff]
  %v190 = vld [vmem:[%s3 + $0xf0] sm:$0xff]
  %v191 = vld [vmem:[%s3 + $0xf8] sm:$0xff]
  %v192 = vld [vmem:[%s3 + $0x100] sm:$0xff]
  %v193 = vld [vmem:[%s3 + $0x108] sm:$0xff]
  %v194 = vld [vmem:[%s3 + $0x110] sm:$0xff]
  %v195 = vld [vmem:[%s3 + $0x118] sm:$0xff]
  %v196 = vld [vmem:[%s3 + $0x120] sm:$0xff]
  %v197 = vld [vmem:[%s3 + $0x128] sm:$0xff]
  %v198 = vld [vmem:[%s3 + $0x130] sm:$0xff]
  %v199 = vld [vmem:[%s3 + $0x138] sm:$0xff]
  %v200 = vld [vmem:[%s3 + $0x140] sm:$0xff]
  %v201 = vld [vmem:[%s3 + $0x148] sm:$0xff]
  %v202 = vld [vmem:[%s3 + $0x150] sm:$0xff]
  %v203 = vld [vmem:[%s3 + $0x158] sm:$0xff]
  %v204 = vld [vmem:[%s3 + $0x160] sm:$0xff]
  %v205 = vld [vmem:[%s3 + $0x168] sm:$0xff]
  %v206 = vld [vmem:[%s3 + $0x170] sm:$0xff]
  %v207 = vld [vmem:[%s3 + $0x178] sm:$0xff]
  %v208 = vld [vmem:[%s3 + $0x180] sm:$0xff]
  %v209 = vld [vmem:[%s3 + $0x188] sm:$0xff]
  %v210 = vld [vmem:[%s3 + $0x190] sm:$0xff]
  %v211 = vld [vmem:[%s3 + $0x198] sm:$0xff]
  %v212 = vld [vmem:[%s3 + $0x1a0] sm:$0xff]
  %v213 = vld [vmem:[%s3 + $0x1a8] sm:$0xff]
  %v214 = vld [vmem:[%s3 + $0x1b0] sm:$0xff]
  %v215 = vld [vmem:[%s3 + $0x1b8] sm:$0xff]
  %v216 = vld [vmem:[%s3 + $0x1c0] sm:$0xff]
  %v217 = vld [vmem:[%s3 + $0x1c8] sm:$0xff]
  %v218 = vld [vmem:[%s3 + $0x1d0] sm:$0xff]
  %v219 = vld [vmem:[%s3 + $0x1d8] sm:$0xff]
  %v220 = vld [vmem:[%s3 + $0x1e0] sm:$0xff]
  %v221 = vld [vmem:[%s3 + $0x1e8] sm:$0xff]
  %v222 = vld [vmem:[%s3 + $0x1f0] sm:$0xff]
  %v223 = vld [vmem:[%s3 + $0x1f8] sm:$0xff]
  %v225 = vlaneseq
  %v226 = vshrl.u32 %v225, 7
  %v227 = vsub.s32 0, %v226
  %v228 = vrot.slane %v39, %v227
  %v229 = vlaneseq
  %v230 = vshrl.u32 %v229, 7
  %v231 = vsub.s32 1, %v230
  %v232 = vrot.slane %v39, %v231
  %235 = vmatprep.subr.mxu0 %v191
  %236 = vmatpush1.msra.mxu0 %v190
  %237 = vmatprep.subr.mxu0 %v189
  %238 = vmatpush1.msra.mxu0 %v188
  %239 = vmatprep.subr.mxu0 %v187
  %240 = vmatpush1.msra.mxu0 %v186
  %241 = vmatprep.subr.mxu0 %v185
  %242 = vmatpush1.msra.mxu0 %v184
  %243 = vmatprep.subr.mxu0 %v183
  %244 = vmatpush1.msra.mxu0 %v182
  %245 = vmatprep.subr.mxu0 %v181
  %246 = vmatpush1.msra.mxu0 %v180
  %247 = vmatprep.subr.mxu0 %v179
  %248 = vmatpush1.msra.mxu0 %v178
  %249 = vmatprep.subr.mxu0 %v177
  %250 = vmatpush1.msra.mxu0 %v176
  %251 = vmatprep.subr.mxu0 %v175
  %252 = vmatpush1.msra.mxu0 %v174
  %253 = vmatprep.subr.mxu0 %v173
  %254 = vmatpush1.msra.mxu0 %v172
  %255 = vmatprep.subr.mxu0 %v171
  %256 = vmatpush1.msra.mxu0 %v170
  %257 = vmatprep.subr.mxu0 %v169
  %258 = vmatpush1.msra.mxu0 %v168
  %259 = vmatprep.subr.mxu0 %v167
  %260 = vmatpush1.msra.mxu0 %v166
  %261 = vmatprep.subr.mxu0 %v165
  %262 = vmatpush1.msra.mxu0 %v164
  %263 = vmatprep.subr.mxu0 %v163
  %264 = vmatpush1.msra.mxu0 %v162
  %265 = vmatprep.subr.mxu0 %v161
  %266 = vmatpush1.msra.mxu0 %v160
  %267 = vmatprep.subr.mxu0 %v223
  %268 = vmatpush2.msra.mxu0 %v222
  %269 = vmatprep.subr.mxu0 %v221
  %270 = vmatpush2.msra.mxu0 %v220
  %271 = vmatprep.subr.mxu0 %v219
  %272 = vmatpush2.msra.mxu0 %v218
  %273 = vmatprep.subr.mxu0 %v217
  %274 = vmatpush2.msra.mxu0 %v216
  %275 = vmatprep.subr.mxu0 %v215
  %276 = vmatpush2.msra.mxu0 %v214
  %277 = vmatprep.subr.mxu0 %v213
  %278 = vmatpush2.msra.mxu0 %v212
  %279 = vmatprep.subr.mxu0 %v211
  %280 = vmatpush2.msra.mxu0 %v210
  %281 = vmatprep.subr.mxu0 %v209
  %282 = vmatpush2.msra.mxu0 %v208
  %283 = vmatprep.subr.mxu0 %v207
  %284 = vmatpush2.msra.mxu0 %v206
  %285 = vmatprep.subr.mxu0 %v205
  %286 = vmatpush2.msra.mxu0 %v204
  %287 = vmatprep.subr.mxu0 %v203
  %288 = vmatpush2.msra.mxu0 %v202
  %289 = vmatprep.subr.mxu0 %v201
  %290 = vmatpush2.msra.mxu0 %v200
  %291 = vmatprep.subr.mxu0 %v199
  %292 = vmatpush2.msra.mxu0 %v198
  %293 = vmatprep.subr.mxu0 %v197
  %294 = vmatpush2.msra.mxu0 %v196
  %295 = vmatprep.subr.mxu0 %v195
  %296 = vmatpush2.msra.mxu0 %v194
  %297 = vmatprep.subr.mxu0 %v193
  %298 = vmatpush2.msra.mxu0 %v192
  %299 = vmatprep.mubr.f32.mxu0 %v159
  %300 = vmatmul.mubr.f32.gmra.mxu0 %v158
  %v301 = vpop.f32.mrf.mxu0
  %v302 = vadd.f32 %v228, %v301
  %v303 = vpop.f32.mrf.mxu0
  %v304 = vadd.f32 %v232, %v303
  %305 = vdwg.mxu0
  %v306 = vmax.f32 %v302, 0.0
  %v307 = vmax.f32 %v304, 0.0
  %v308 = vld [vmem:[%s5] sm:$0xff]
  %v309 = vld [vmem:[%s5 + $0x8] sm:$0xff]
  %v310 = vld [vmem:[%s5 + $0x10] sm:$0xff]
  %v311 = vld [vmem:[%s5 + $0x18] sm:$0xff]
  %v312 = vld [vmem:[%s5 + $0x20] sm:$0xff]
  %v313 = vld [vmem:[%s5 + $0x28] sm:$0xff]
  %v314 = vld [vmem:[%s5 + $0x30] sm:$0xff]
  %v315 = vld [vmem:[%s5 + $0x38] sm:$0xff]
  %v316 = vld [vmem:[%s5 + $0x40] sm:$0xff]
  %v317 = vld [vmem:[%s5 + $0x48] sm:$0xff]
  %v318 = vld [vmem:[%s5 + $0x50] sm:$0xff]
  %v319 = vld [vmem:[%s5 + $0x58] sm:$0xff]
  %v320 = vld [vmem:[%s5 + $0x60] sm:$0xff]
  %v321 = vld [vmem:[%s5 + $0x68] sm:$0xff]
  %v322 = vld [vmem:[%s5 + $0x70] sm:$0xff]
  %v323 = vld [vmem:[%s5 + $0x78] sm:$0xff]
  %v324 = vld [vmem:[%s5 + $0x80] sm:$0xff]
  %v325 = vld [vmem:[%s5 + $0x88] sm:$0xff]
  %v326 = vld [vmem:[%s5 + $0x90] sm:$0xff]
  %v327 = vld [vmem:[%s5 + $0x98] sm:$0xff]
  %v328 = vld [vmem:[%s5 + $0xa0] sm:$0xff]
  %v329 = vld [vmem:[%s5 + $0xa8] sm:$0xff]
  %v330 = vld [vmem:[%s5 + $0xb0] sm:$0xff]
  %v331 = vld [vmem:[%s5 + $0xb8] sm:$0xff]
  %v332 = vld [vmem:[%s5 + $0xc0] sm:$0xff]
  %v333 = vld [vmem:[%s5 + $0xc8] sm:$0xff]
  %v334 = vld [vmem:[%s5 + $0xd0] sm:$0xff]
  %v335 = vld [vmem:[%s5 + $0xd8] sm:$0xff]
  %v336 = vld [vmem:[%s5 + $0xe0] sm:$0xff]
  %v337 = vld [vmem:[%s5 + $0xe8] sm:$0xff]
  %v338 = vld [vmem:[%s5 + $0xf0] sm:$0xff]
  %v339 = vld [vmem:[%s5 + $0xf8] sm:$0xff]
  %v340 = vld [vmem:[%s5 + $0x100] sm:$0xff]
  %v341 = vld [vmem:[%s5 + $0x108] sm:$0xff]
  %v342 = vld [vmem:[%s5 + $0x110] sm:$0xff]
  %v343 = vld [vmem:[%s5 + $0x118] sm:$0xff]
  %v344 = vld [vmem:[%s5 + $0x120] sm:$0xff]
  %v345 = vld [vmem:[%s5 + $0x128] sm:$0xff]
  %v346 = vld [vmem:[%s5 + $0x130] sm:$0xff]
  %v347 = vld [vmem:[%s5 + $0x138] sm:$0xff]
  %v348 = vld [vmem:[%s5 + $0x140] sm:$0xff]
  %v349 = vld [vmem:[%s5 + $0x148] sm:$0xff]
  %v350 = vld [vmem:[%s5 + $0x150] sm:$0xff]
  %v351 = vld [vmem:[%s5 + $0x158] sm:$0xff]
  %v352 = vld [vmem:[%s5 + $0x160] sm:$0xff]
  %v353 = vld [vmem:[%s5 + $0x168] sm:$0xff]
  %v354 = vld [vmem:[%s5 + $0x170] sm:$0xff]
  %v355 = vld [vmem:[%s5 + $0x178] sm:$0xff]
  %v356 = vld [vmem:[%s5 + $0x180] sm:$0xff]
  %v357 = vld [vmem:[%s5 + $0x188] sm:$0xff]
  %v358 = vld [vmem:[%s5 + $0x190] sm:$0xff]
  %v359 = vld [vmem:[%s5 + $0x198] sm:$0xff]
  %v360 = vld [vmem:[%s5 + $0x1a0] sm:$0xff]
  %v361 = vld [vmem:[%s5 + $0x1a8] sm:$0xff]
  %v362 = vld [vmem:[%s5 + $0x1b0] sm:$0xff]
  %v363 = vld [vmem:[%s5 + $0x1b8] sm:$0xff]
  %v364 = vld [vmem:[%s5 + $0x1c0] sm:$0xff]
  %v365 = vld [vmem:[%s5 + $0x1c8] sm:$0xff]
  %v366 = vld [vmem:[%s5 + $0x1d0] sm:$0xff]
  %v367 = vld [vmem:[%s5 + $0x1d8] sm:$0xff]
  %v368 = vld [vmem:[%s5 + $0x1e0] sm:$0xff]
  %v369 = vld [vmem:[%s5 + $0x1e8] sm:$0xff]
  %v370 = vld [vmem:[%s5 + $0x1f0] sm:$0xff]
  %v371 = vld [vmem:[%s5 + $0x1f8] sm:$0xff]
  %v373 = vlaneseq
  %v374 = vshrl.u32 %v373, 7
  %v375 = vsub.s32 0, %v374
  %v376 = vrot.slane %v40, %v375
  %v377 = vlaneseq
  %v378 = vshrl.u32 %v377, 7
  %v379 = vsub.s32 1, %v378
  %v380 = vrot.slane %v40, %v379
  %383 = vmatprep.subr.mxu0 %v339
  %384 = vmatpush1.msra.mxu0 %v338
  %385 = vmatprep.subr.mxu0 %v337
  %386 = vmatpush1.msra.mxu0 %v336
  %387 = vmatprep.subr.mxu0 %v335
  %388 = vmatpush1.msra.mxu0 %v334
  %389 = vmatprep.subr.mxu0 %v333
  %390 = vmatpush1.msra.mxu0 %v332
  %391 = vmatprep.subr.mxu0 %v331
  %392 = vmatpush1.msra.mxu0 %v330
  %393 = vmatprep.subr.mxu0 %v329
  %394 = vmatpush1.msra.mxu0 %v328
  %395 = vmatprep.subr.mxu0 %v327
  %396 = vmatpush1.msra.mxu0 %v326
  %397 = vmatprep.subr.mxu0 %v325
  %398 = vmatpush1.msra.mxu0 %v324
  %399 = vmatprep.subr.mxu0 %v323
  %400 = vmatpush1.msra.mxu0 %v322
  %401 = vmatprep.subr.mxu0 %v321
  %402 = vmatpush1.msra.mxu0 %v320
  %403 = vmatprep.subr.mxu0 %v319
  %404 = vmatpush1.msra.mxu0 %v318
  %405 = vmatprep.subr.mxu0 %v317
  %406 = vmatpush1.msra.mxu0 %v316
  %407 = vmatprep.subr.mxu0 %v315
  %408 = vmatpush1.msra.mxu0 %v314
  %409 = vmatprep.subr.mxu0 %v313
  %410 = vmatpush1.msra.mxu0 %v312
  %411 = vmatprep.subr.mxu0 %v311
  %412 = vmatpush1.msra.mxu0 %v310
  %413 = vmatprep.subr.mxu0 %v309
  %414 = vmatpush1.msra.mxu0 %v308
  %415 = vmatprep.subr.mxu0 %v371
  %416 = vmatpush2.msra.mxu0 %v370
  %417 = vmatprep.subr.mxu0 %v369
  %418 = vmatpush2.msra.mxu0 %v368
  %419 = vmatprep.subr.mxu0 %v367
  %420 = vmatpush2.msra.mxu0 %v366
  %421 = vmatprep.subr.mxu0 %v365
  %422 = vmatpush2.msra.mxu0 %v364
  %423 = vmatprep.subr.mxu0 %v363
  %424 = vmatpush2.msra.mxu0 %v362
  %425 = vmatprep.subr.mxu0 %v361
  %426 = vmatpush2.msra.mxu0 %v360
  %427 = vmatprep.subr.mxu0 %v359
  %428 = vmatpush2.msra.mxu0 %v358
  %429 = vmatprep.subr.mxu0 %v357
  %430 = vmatpush2.msra.mxu0 %v356
  %431 = vmatprep.subr.mxu0 %v355
  %432 = vmatpush2.msra.mxu0 %v354
  %433 = vmatprep.subr.mxu0 %v353
  %434 = vmatpush2.msra.mxu0 %v352
  %435 = vmatprep.subr.mxu0 %v351
  %436 = vmatpush2.msra.mxu0 %v350
  %437 = vmatprep.subr.mxu0 %v349
  %438 = vmatpush2.msra.mxu0 %v348
  %439 = vmatprep.subr.mxu0 %v347
  %440 = vmatpush2.msra.mxu0 %v346
  %441 = vmatprep.subr.mxu0 %v345
  %442 = vmatpush2.msra.mxu0 %v344
  %443 = vmatprep.subr.mxu0 %v343
  %444 = vmatpush2.msra.mxu0 %v342
  %445 = vmatprep.subr.mxu0 %v341
  %446 = vmatpush2.msra.mxu0 %v340
  %447 = vmatprep.mubr.f32.mxu0 %v307
  %448 = vmatmul.mubr.f32.gmra.mxu0 %v306
  %v449 = vpop.f32.mrf.mxu0
  %v450 = vadd.f32 %v376, %v449
  %v451 = vpop.f32.mrf.mxu0
  %v452 = vadd.f32 %v380, %v451
  %453 = vdwg.mxu0
  %v454 = vmax.f32 %v450, 0.0
  %v455 = vmax.f32 %v452, 0.0
  %v456 = vld [vmem:[%s7] sm:$0xff]
  %v457 = vld [vmem:[%s7 + $0x8] sm:$0xff]
  %v458 = vld [vmem:[%s7 + $0x10] sm:$0xff]
  %v459 = vld [vmem:[%s7 + $0x18] sm:$0xff]
  %v460 = vld [vmem:[%s7 + $0x20] sm:$0xff]
  %v461 = vld [vmem:[%s7 + $0x28] sm:$0xff]
  %v462 = vld [vmem:[%s7 + $0x30] sm:$0xff]
  %v463 = vld [vmem:[%s7 + $0x38] sm:$0xff]
  %v464 = vld [vmem:[%s7 + $0x40] sm:$0xff]
  %v465 = vld [vmem:[%s7 + $0x48] sm:$0xff]
  %v466 = vld [vmem:[%s7 + $0x50] sm:$0xff]
  %v467 = vld [vmem:[%s7 + $0x58] sm:$0xff]
  %v468 = vld [vmem:[%s7 + $0x60] sm:$0xff]
  %v469 = vld [vmem:[%s7 + $0x68] sm:$0xff]
  %v470 = vld [vmem:[%s7 + $0x70] sm:$0xff]
  %v471 = vld [vmem:[%s7 + $0x78] sm:$0xff]
  %v472 = vld [vmem:[%s7 + $0x80] sm:$0xff]
  %v473 = vld [vmem:[%s7 + $0x88] sm:$0xff]
  %v474 = vld [vmem:[%s7 + $0x90] sm:$0xff]
  %v475 = vld [vmem:[%s7 + $0x98] sm:$0xff]
  %v476 = vld [vmem:[%s7 + $0xa0] sm:$0xff]
  %v477 = vld [vmem:[%s7 + $0xa8] sm:$0xff]
  %v478 = vld [vmem:[%s7 + $0xb0] sm:$0xff]
  %v479 = vld [vmem:[%s7 + $0xb8] sm:$0xff]
  %v480 = vld [vmem:[%s7 + $0xc0] sm:$0xff]
  %v481 = vld [vmem:[%s7 + $0xc8] sm:$0xff]
  %v482 = vld [vmem:[%s7 + $0xd0] sm:$0xff]
  %v483 = vld [vmem:[%s7 + $0xd8] sm:$0xff]
  %v484 = vld [vmem:[%s7 + $0xe0] sm:$0xff]
  %v485 = vld [vmem:[%s7 + $0xe8] sm:$0xff]
  %v486 = vld [vmem:[%s7 + $0xf0] sm:$0xff]
  %v487 = vld [vmem:[%s7 + $0xf8] sm:$0xff]
  %v488 = vld [vmem:[%s7 + $0x100] sm:$0xff]
  %v489 = vld [vmem:[%s7 + $0x108] sm:$0xff]
  %v490 = vld [vmem:[%s7 + $0x110] sm:$0xff]
  %v491 = vld [vmem:[%s7 + $0x118] sm:$0xff]
  %v492 = vld [vmem:[%s7 + $0x120] sm:$0xff]
  %v493 = vld [vmem:[%s7 + $0x128] sm:$0xff]
  %v494 = vld [vmem:[%s7 + $0x130] sm:$0xff]
  %v495 = vld [vmem:[%s7 + $0x138] sm:$0xff]
  %v496 = vld [vmem:[%s7 + $0x140] sm:$0xff]
  %v497 = vld [vmem:[%s7 + $0x148] sm:$0xff]
  %v498 = vld [vmem:[%s7 + $0x150] sm:$0xff]
  %v499 = vld [vmem:[%s7 + $0x158] sm:$0xff]
  %v500 = vld [vmem:[%s7 + $0x160] sm:$0xff]
  %v501 = vld [vmem:[%s7 + $0x168] sm:$0xff]
  %v502 = vld [vmem:[%s7 + $0x170] sm:$0xff]
  %v503 = vld [vmem:[%s7 + $0x178] sm:$0xff]
  %v504 = vld [vmem:[%s7 + $0x180] sm:$0xff]
  %v505 = vld [vmem:[%s7 + $0x188] sm:$0xff]
  %v506 = vld [vmem:[%s7 + $0x190] sm:$0xff]
  %v507 = vld [vmem:[%s7 + $0x198] sm:$0xff]
  %v508 = vld [vmem:[%s7 + $0x1a0] sm:$0xff]
  %v509 = vld [vmem:[%s7 + $0x1a8] sm:$0xff]
  %v510 = vld [vmem:[%s7 + $0x1b0] sm:$0xff]
  %v511 = vld [vmem:[%s7 + $0x1b8] sm:$0xff]
  %v512 = vld [vmem:[%s7 + $0x1c0] sm:$0xff]
  %v513 = vld [vmem:[%s7 + $0x1c8] sm:$0xff]
  %v514 = vld [vmem:[%s7 + $0x1d0] sm:$0xff]
  %v515 = vld [vmem:[%s7 + $0x1d8] sm:$0xff]
  %v516 = vld [vmem:[%s7 + $0x1e0] sm:$0xff]
  %v517 = vld [vmem:[%s7 + $0x1e8] sm:$0xff]
  %v518 = vld [vmem:[%s7 + $0x1f0] sm:$0xff]
  %v519 = vld [vmem:[%s7 + $0x1f8] sm:$0xff]
  %v521 = vlaneseq
  %v522 = vshrl.u32 %v521, 7
  %v523 = vsub.s32 0, %v522
  %v524 = vrot.slane %v41, %v523
  %v525 = vlaneseq
  %v526 = vshrl.u32 %v525, 7
  %v527 = vsub.s32 1, %v526
  %v528 = vrot.slane %v41, %v527
  %531 = vmatprep.subr.mxu0 %v487
  %532 = vmatpush1.msra.mxu0 %v486
  %533 = vmatprep.subr.mxu0 %v485
  %534 = vmatpush1.msra.mxu0 %v484
  %535 = vmatprep.subr.mxu0 %v483
  %536 = vmatpush1.msra.mxu0 %v482
  %537 = vmatprep.subr.mxu0 %v481
  %538 = vmatpush1.msra.mxu0 %v480
  %539 = vmatprep.subr.mxu0 %v479
  %540 = vmatpush1.msra.mxu0 %v478
  %541 = vmatprep.subr.mxu0 %v477
  %542 = vmatpush1.msra.mxu0 %v476
  %543 = vmatprep.subr.mxu0 %v475
  %544 = vmatpush1.msra.mxu0 %v474
  %545 = vmatprep.subr.mxu0 %v473
  %546 = vmatpush1.msra.mxu0 %v472
  %547 = vmatprep.subr.mxu0 %v471
  %548 = vmatpush1.msra.mxu0 %v470
  %549 = vmatprep.subr.mxu0 %v469
  %550 = vmatpush1.msra.mxu0 %v468
  %551 = vmatprep.subr.mxu0 %v467
  %552 = vmatpush1.msra.mxu0 %v466
  %553 = vmatprep.subr.mxu0 %v465
  %554 = vmatpush1.msra.mxu0 %v464
  %555 = vmatprep.subr.mxu0 %v463
  %556 = vmatpush1.msra.mxu0 %v462
  %557 = vmatprep.subr.mxu0 %v461
  %558 = vmatpush1.msra.mxu0 %v460
  %559 = vmatprep.subr.mxu0 %v459
  %560 = vmatpush1.msra.mxu0 %v458
  %561 = vmatprep.subr.mxu0 %v457
  %562 = vmatpush1.msra.mxu0 %v456
  %563 = vmatprep.subr.mxu0 %v519
  %564 = vmatpush2.msra.mxu0 %v518
  %565 = vmatprep.subr.mxu0 %v517
  %566 = vmatpush2.msra.mxu0 %v516
  %567 = vmatprep.subr.mxu0 %v515
  %568 = vmatpush2.msra.mxu0 %v514
  %569 = vmatprep.subr.mxu0 %v513
  %570 = vmatpush2.msra.mxu0 %v512
  %571 = vmatprep.subr.mxu0 %v511
  %572 = vmatpush2.msra.mxu0 %v510
  %573 = vmatprep.subr.mxu0 %v509
  %574 = vmatpush2.msra.mxu0 %v508
  %575 = vmatprep.subr.mxu0 %v507
  %576 = vmatpush2.msra.mxu0 %v506
  %577 = vmatprep.subr.mxu0 %v505
  %578 = vmatpush2.msra.mxu0 %v504
  %579 = vmatprep.subr.mxu0 %v503
  %580 = vmatpush2.msra.mxu0 %v502
  %581 = vmatprep.subr.mxu0 %v501
  %582 = vmatpush2.msra.mxu0 %v500
  %583 = vmatprep.subr.mxu0 %v499
  %584 = vmatpush2.msra.mxu0 %v498
  %585 = vmatprep.subr.mxu0 %v497
  %586 = vmatpush2.msra.mxu0 %v496
  %587 = vmatprep.subr.mxu0 %v495
  %588 = vmatpush2.msra.mxu0 %v494
  %589 = vmatprep.subr.mxu0 %v493
  %590 = vmatpush2.msra.mxu0 %v492
  %591 = vmatprep.subr.mxu0 %v491
  %592 = vmatpush2.msra.mxu0 %v490
  %593 = vmatprep.subr.mxu0 %v489
  %594 = vmatpush2.msra.mxu0 %v488
  %595 = vmatprep.mubr.f32.mxu0 %v455
  %596 = vmatmul.mubr.f32.gmra.mxu0 %v454
  %v597 = vpop.f32.mrf.mxu0
  %v598 = vadd.f32 %v524, %v597
  %v599 = vpop.f32.mrf.mxu0
  %v600 = vadd.f32 %v528, %v599
  %601 = vdwg.mxu0
  %v602 = vmax.f32 %v598, 0.0
  %v603 = vmax.f32 %v600, 0.0
  %v604 = vld [vmem:[%s9] sm:$0xff]
  %v605 = vld [vmem:[%s9 + $0x8] sm:$0xff]
  %v606 = vld [vmem:[%s9 + $0x10] sm:$0xff]
  %v607 = vld [vmem:[%s9 + $0x18] sm:$0xff]
  %v608 = vld [vmem:[%s9 + $0x20] sm:$0xff]
  %v609 = vld [vmem:[%s9 + $0x28] sm:$0xff]
  %v610 = vld [vmem:[%s9 + $0x30] sm:$0xff]
  %v611 = vld [vmem:[%s9 + $0x38] sm:$0xff]
  %v612 = vld [vmem:[%s9 + $0x40] sm:$0xff]
  %v613 = vld [vmem:[%s9 + $0x48] sm:$0xff]
  %v614 = vld [vmem:[%s9 + $0x50] sm:$0xff]
  %v615 = vld [vmem:[%s9 + $0x58] sm:$0xff]
  %v616 = vld [vmem:[%s9 + $0x60] sm:$0xff]
  %v617 = vld [vmem:[%s9 + $0x68] sm:$0xff]
  %v618 = vld [vmem:[%s9 + $0x70] sm:$0xff]
  %v619 = vld [vmem:[%s9 + $0x78] sm:$0xff]
  %v620 = vld [vmem:[%s9 + $0x80] sm:$0xff]
  %v621 = vld [vmem:[%s9 + $0x88] sm:$0xff]
  %v622 = vld [vmem:[%s9 + $0x90] sm:$0xff]
  %v623 = vld [vmem:[%s9 + $0x98] sm:$0xff]
  %v624 = vld [vmem:[%s9 + $0xa0] sm:$0xff]
  %v625 = vld [vmem:[%s9 + $0xa8] sm:$0xff]
  %v626 = vld [vmem:[%s9 + $0xb0] sm:$0xff]
  %v627 = vld [vmem:[%s9 + $0xb8] sm:$0xff]
  %v628 = vld [vmem:[%s9 + $0xc0] sm:$0xff]
  %v629 = vld [vmem:[%s9 + $0xc8] sm:$0xff]
  %v630 = vld [vmem:[%s9 + $0xd0] sm:$0xff]
  %v631 = vld [vmem:[%s9 + $0xd8] sm:$0xff]
  %v632 = vld [vmem:[%s9 + $0xe0] sm:$0xff]
  %v633 = vld [vmem:[%s9 + $0xe8] sm:$0xff]
  %v634 = vld [vmem:[%s9 + $0xf0] sm:$0xff]
  %v635 = vld [vmem:[%s9 + $0xf8] sm:$0xff]
  %v637 = vlaneseq
  %v638 = vshrl.u32 %v637, 7
  %v639 = vsub.s32 0, %v638
  %v640 = vrot.slane %v42, %v639
  %642 = vmatprep.subr.mxu0 0.0
  %643 = vmatpush1.msra.mxu0 %v619
  %644 = vmatprep.subr.mxu0 0.0
  %645 = vmatpush1.msra.mxu0 %v618
  %646 = vmatprep.subr.mxu0 0.0
  %647 = vmatpush1.msra.mxu0 %v617
  %648 = vmatprep.subr.mxu0 0.0
  %649 = vmatpush1.msra.mxu0 %v616
  %650 = vmatprep.subr.mxu0 0.0
  %651 = vmatpush1.msra.mxu0 %v615
  %652 = vmatprep.subr.mxu0 0.0
  %653 = vmatpush1.msra.mxu0 %v614
  %654 = vmatprep.subr.mxu0 0.0
  %655 = vmatpush1.msra.mxu0 %v613
  %656 = vmatprep.subr.mxu0 0.0
  %657 = vmatpush1.msra.mxu0 %v612
  %658 = vmatprep.subr.mxu0 0.0
  %659 = vmatpush1.msra.mxu0 %v611
  %660 = vmatprep.subr.mxu0 0.0
  %661 = vmatpush1.msra.mxu0 %v610
  %662 = vmatprep.subr.mxu0 0.0
  %663 = vmatpush1.msra.mxu0 %v609
  %664 = vmatprep.subr.mxu0 0.0
  %665 = vmatpush1.msra.mxu0 %v608
  %666 = vmatprep.subr.mxu0 0.0
  %667 = vmatpush1.msra.mxu0 %v607
  %668 = vmatprep.subr.mxu0 0.0
  %669 = vmatpush1.msra.mxu0 %v606
  %670 = vmatprep.subr.mxu0 0.0
  %671 = vmatpush1.msra.mxu0 %v605
  %672 = vmatprep.subr.mxu0 0.0
  %673 = vmatpush1.msra.mxu0 %v604
  %674 = vmatprep.subr.mxu0 0.0
  %675 = vmatpush2.msra.mxu0 %v635
  %676 = vmatprep.subr.mxu0 0.0
  %677 = vmatpush2.msra.mxu0 %v634
  %678 = vmatprep.subr.mxu0 0.0
  %679 = vmatpush2.msra.mxu0 %v633
  %680 = vmatprep.subr.mxu0 0.0
  %681 = vmatpush2.msra.mxu0 %v632
  %682 = vmatprep.subr.mxu0 0.0
  %683 = vmatpush2.msra.mxu0 %v631
  %684 = vmatprep.subr.mxu0 0.0
  %685 = vmatpush2.msra.mxu0 %v630
  %686 = vmatprep.subr.mxu0 0.0
  %687 = vmatpush2.msra.mxu0 %v629
  %688 = vmatprep.subr.mxu0 0.0
  %689 = vmatpush2.msra.mxu0 %v628
  %690 = vmatprep.subr.mxu0 0.0
  %691 = vmatpush2.msra.mxu0 %v627
  %692 = vmatprep.subr.mxu0 0.0
  %693 = vmatpush2.msra.mxu0 %v626
  %694 = vmatprep.subr.mxu0 0.0
  %695 = vmatpush2.msra.mxu0 %v625
  %696 = vmatprep.subr.mxu0 0.0
  %697 = vmatpush2.msra.mxu0 %v624
  %698 = vmatprep.subr.mxu0 0.0
  %699 = vmatpush2.msra.mxu0 %v623
  %700 = vmatprep.subr.mxu0 0.0
  %701 = vmatpush2.msra.mxu0 %v622
  %702 = vmatprep.subr.mxu0 0.0
  %703 = vmatpush2.msra.mxu0 %v621
  %704 = vmatprep.subr.mxu0 0.0
  %705 = vmatpush2.msra.mxu0 %v620
  %706 = vmatprep.mubr.f32.mxu0 %v603
  %707 = vmatmul.mubr.f32.gmra.mxu0 %v602
  %v708 = vpop.f32.mrf.mxu0
  %v709 = vadd.f32 %v640, %v708
  %v710 = vpop.f32.mrf.mxu0
  %711 = vdwg.mxu0
  %vm712 = vcmask 261120
  %713 = vst.msk [vmem:[%s11] sm:$0xff] %vm712, %v709
  // Predicated region
  $region46: #{tenny_forward.1} parent=0 // pred_check
    _
  $region47: #{tenny_forward.1} parent=0 // pred_check_branch
    %715 = sbr.rel (0) target = $region49
  $region48: #{tenny_forward.1} parent=0 // pred_region
    _
  $region49: #{tenny_forward.1} parent=0 // pred_fallthru
    _
  // Predicated region
  $region50: #{tenny_forward.1} parent=0 // pred_check
    _
  $region51: #{tenny_forward.1} parent=0 // pred_check_branch
    %717 = sbr.rel (0) target = $region53
  $region52: #{tenny_forward.1} parent=0 // pred_region
    _
  $region53: #{tenny_forward.1} parent=0 // pred_fallthru
    _

</llo_original>
